<compile_context>
chip_gen: v5e
topology: v5e:2x2
jax: 0.10.0
libtpu: 0.0.40
codegen_flags: <defaults>
</compile_context>

<pallas_src>
import functools

import jax
import jax.numpy as jnp
from jax.experimental import pallas as pl
from jax.experimental.pallas import tpu as pltpu

_LANES = 128            # vreg lane width; hidden dims are padded to this once
_H1, _H2, _H3 = 64, 32, 16
_TB_MAX = 2048          # batch tile (rows); well inside 64 MiB VMEM (v7x)


def _round_up(n, m):
    return ((n + m - 1) // m) * m


def _packed_layout(input_size):
    """Static row offsets of each section inside the packed (R, 128) buffer.

    All offsets/extents are multiples of 8 (sublane) so every kernel-side
    static slice is tile-aligned.
    """
    k_pad = _round_up(input_size, 8)
    o_w1 = 0
    o_w2 = o_w1 + k_pad                      # W1 padded to (k_pad, 128)
    o_w3 = o_w2 + _LANES                     # W2 padded to (128, 128)
    o_tail = o_w3 + _LANES                   # W3 padded to (128, 128)
    rows = o_tail + 8                        # 8-row tail: [w4^T, b1, b2, b3, b4, 0..]
    return k_pad, o_w1, o_w2, o_w3, o_tail, rows


def pack_params(params, input_size):
    """Pack all weights/biases into ONE lane-padded (R, 128) f32 buffer.

    Zero padding keeps the math exact: padded input channels contribute 0 and
    padded output channels stay 0 through the bias add and ReLU, so results
    match the unpadded reference up to f32 accumulation order.
    """
    _, o_w1, o_w2, o_w3, o_tail, rows = _packed_layout(input_size)
    buf = jnp.zeros((rows, _LANES), jnp.float32)

    def put(b, r0, a):
        a = jnp.asarray(a, jnp.float32)
        return b.at[r0:r0 + a.shape[0], :a.shape[1]].set(a)

    # Weights stored as (in, out) so the kernel computes x @ W (== x @ W_pt.T).
    buf = put(buf, o_w1, params["w1"])                        # (K, 64)
    buf = put(buf, o_w2, params["w2"])                        # (64, 32)
    buf = put(buf, o_w3, params["w3"])                        # (32, 16)
    buf = put(buf, o_tail + 0, params["w4"].reshape(1, _H3))  # w4 as a (1, 16) row
    buf = put(buf, o_tail + 1, params["b1"])                  # (1, 64)
    buf = put(buf, o_tail + 2, params["b2"])                  # (1, 32)
    buf = put(buf, o_tail + 3, params["b3"])                  # (1, 16)
    buf = put(buf, o_tail + 4, params["b4"])                  # (1, 1)
    return buf


def _mlp_kernel(x_ref, p_ref, o_ref, *, k_pad, o_w1, o_w2, o_w3, o_tail):
    x = x_ref[...]                                    # (TB, k_pad)

    # Static, tile-aligned slices into the single packed parameter buffer
    # (zero extra DMAs; params are VMEM-resident across all grid steps).
    w1 = p_ref[o_w1:o_w1 + k_pad, :]                  # (k_pad, 128)
    w2 = p_ref[o_w2:o_w2 + _LANES, :]                 # (128, 128)
    w3 = p_ref[o_w3:o_w3 + _LANES, :]                 # (128, 128)
    w4 = p_ref[o_tail + 0:o_tail + 1, :]              # (1, 128) == padded w4^T row
    b1 = p_ref[o_tail + 1:o_tail + 2, :]              # (1, 128)
    b2 = p_ref[o_tail + 2:o_tail + 3, :]
    b3 = p_ref[o_tail + 3:o_tail + 4, :]
    b4 = p_ref[o_tail + 4:o_tail + 5, 0:1]            # (1, 1)

    # Layers 1-3 on the MXU over uniform (TB, 128) tiles; ReLU on the VPU.
    # (Dropout p=0.3 / p=0.2 are identity at inference.)
    h = jnp.maximum(jnp.dot(x, w1, preferred_element_type=jnp.float32) + b1, 0.0)
    h = jnp.maximum(jnp.dot(h, w2, preferred_element_type=jnp.float32) + b2, 0.0)
    h = jnp.maximum(jnp.dot(h, w3, preferred_element_type=jnp.float32) + b3, 0.0)

    # Layer 4 (16 -> 1): VPU multiply + XLU lane reduction instead of an N=1
    # MXU matmul (skips one MXU push/pop on the serial critical path).
    r = jnp.sum(h * w4, axis=-1)                      # (TB,)
    # Lane-dense store: batch lives on the lane axis of the (1, TB) output row.
    o_ref[...] = (r[None, :] + b4).astype(o_ref.dtype)


def root_volume_regressor(x, packed):
    """Forward pass. x: (B, K) f32; packed: output of pack_params(params, K)."""
    B, K = x.shape
    k_pad, o_w1, o_w2, o_w3, o_tail, rows = _packed_layout(K)
    assert packed.shape == (rows, _LANES), (packed.shape, rows)

    # Batch tiling: single full-array block for small B, 2048-row tiles for
    # large B (x/out double-buffered against compute; ~1 MiB/step + ~150 KiB
    # resident params, safely inside VMEM on v5e/v6e/v7x).
    tb = min(_TB_MAX, _round_up(B, 8))
    b_pad = _round_up(B, tb)
    pad_rows = b_pad - B
    pad_cols = k_pad - K
    if pad_rows or pad_cols:
        # Zero padding: ragged last batch tile + sublane-aligned feature dim.
        x = jnp.pad(x, ((0, pad_rows), (0, pad_cols)))
    grid = (b_pad // tb,)

    kernel = functools.partial(_mlp_kernel, k_pad=k_pad, o_w1=o_w1, o_w2=o_w2,
                               o_w3=o_w3, o_tail=o_tail)

    out = pl.pallas_call(
        kernel,
        out_shape=jax.ShapeDtypeStruct((1, b_pad), jnp.float32),
        grid=grid,
        in_specs=[
            pl.BlockSpec((tb, k_pad), lambda i: (i, 0)),      # batch tile of x
            pl.BlockSpec((rows, _LANES), lambda i: (0, 0)),   # params stay resident
        ],
        out_specs=pl.BlockSpec((1, tb), lambda i: (0, i)),    # lane-dense output
        compiler_params=pltpu.CompilerParams(
            dimension_semantics=("parallel",),  # shard batch tiles across TCs
        ),
    )(x, packed)
    return out[0, :B, None]                                   # (B, 1)


def init_params(key, input_size):
    """Deterministic PyTorch-style init: U(-1/sqrt(fan_in), 1/sqrt(fan_in))."""
    dims = [(input_size, _H1), (_H1, _H2), (_H2, _H3), (_H3, 1)]
    params = {}
    keys = jax.random.split(key, 2 * len(dims))
    for i, (fan_in, fan_out) in enumerate(dims):
        bound = 1.0 / (fan_in ** 0.5)
        params[f"w{i + 1}"] = jax.random.uniform(
            keys[2 * i], (fan_in, fan_out), minval=-bound, maxval=bound,
            dtype=jnp.float32)
        params[f"b{i + 1}"] = jax.random.uniform(
            keys[2 * i + 1], (1, fan_out), minval=-bound, maxval=bound,
            dtype=jnp.float32)
    return params


def reference_forward(x, params):
    """Plain-JAX reference (eval-mode semantics of the PyTorch module)."""
    h = jnp.maximum(x @ params["w1"] + params["b1"], 0.0)
    h = jnp.maximum(h @ params["w2"] + params["b2"], 0.0)
    h = jnp.maximum(h @ params["w3"] + params["b3"], 0.0)
    return h @ params["w4"] + params["b4"]


if __name__ == "__main__":
    key = jax.random.PRNGKey(0)
    k_params, k_x = jax.random.split(key)

    batch = 8
    input_size = 32

    params = init_params(k_params, input_size)
    packed = pack_params(params, input_size)        # pack once, reuse every call
    x = jax.random.normal(k_x, (batch, input_size), dtype=jnp.float32)

    out = root_volume_regressor(x, packed)
    out = jax.block_until_ready(out)

    ref = reference_forward(x, params)
    assert out.shape == (batch, 1), out.shape
    err = jnp.max(jnp.abs(out - ref))
    assert jnp.allclose(out, ref, atol=1e-4, rtol=1e-4), f"max abs err {err}"

    print("KERNEL_OK")
</pallas_src>

<mosaic_0001>
module attributes {stable_mosaic.version = 11 : i64} {
  func.func @_mlp_kernel(%arg0: i32, %arg1: memref<8x32xf32, #tpu.memory_space<vmem>>, %arg2: memref<296x128xf32, #tpu.memory_space<vmem>>, %arg3: memref<1x8xf32, #tpu.memory_space<vmem>>) attributes {dimension_semantics = [#tpu.dimension_semantics<parallel>], iteration_bounds = array<i64: 1>, scalar_prefetch = 0 : i64, scratch_operands = 0 : i64, tpu.core_type = #tpu.core_type<tc>, window_params = [{transform_indices = @transform_0, window_bounds = array<i64: 8, 32>}, {pipeline_mode = #tpu.pipeline_mode<synchronous>, transform_indices = @transform_1, window_bounds = array<i64: 296, 128>}, {transform_indices = @transform_2, window_bounds = array<i64: 1, 8>}]} {
    %c0 = arith.constant 0 : index
    %c0_0 = arith.constant 0 : index
    %0 = vector.load %arg1[%c0, %c0_0] : memref<8x32xf32, #tpu.memory_space<vmem>>, vector<8x32xf32>
    %c0_1 = arith.constant 0 : index
    %c0_2 = arith.constant 0 : index
    %1 = vector.load %arg2[%c0_1, %c0_2] : memref<296x128xf32, #tpu.memory_space<vmem>>, vector<32x128xf32>
    %c32 = arith.constant 32 : index
    %c0_3 = arith.constant 0 : index
    %2 = vector.load %arg2[%c32, %c0_3] : memref<296x128xf32, #tpu.memory_space<vmem>>, vector<128x128xf32>
    %c160 = arith.constant 160 : index
    %c0_4 = arith.constant 0 : index
    %3 = vector.load %arg2[%c160, %c0_4] : memref<296x128xf32, #tpu.memory_space<vmem>>, vector<128x128xf32>
    %c288 = arith.constant 288 : index
    %c0_5 = arith.constant 0 : index
    %4 = vector.load %arg2[%c288, %c0_5] : memref<296x128xf32, #tpu.memory_space<vmem>>, vector<1x128xf32>
    %c289 = arith.constant 289 : index
    %c0_6 = arith.constant 0 : index
    %5 = vector.load %arg2[%c289, %c0_6] : memref<296x128xf32, #tpu.memory_space<vmem>>, vector<1x128xf32>
    %c290 = arith.constant 290 : index
    %c0_7 = arith.constant 0 : index
    %6 = vector.load %arg2[%c290, %c0_7] : memref<296x128xf32, #tpu.memory_space<vmem>>, vector<1x128xf32>
    %c291 = arith.constant 291 : index
    %c0_8 = arith.constant 0 : index
    %7 = vector.load %arg2[%c291, %c0_8] : memref<296x128xf32, #tpu.memory_space<vmem>>, vector<1x128xf32>
    %c292 = arith.constant 292 : index
    %c0_9 = arith.constant 0 : index
    %8 = vector.load %arg2[%c292, %c0_9] : memref<296x128xf32, #tpu.memory_space<vmem>>, vector<1x1xf32>
    %cst = arith.constant dense<0.000000e+00> : vector<8x128xf32>
    %9 = tpu.matmul %0, %1, %cst {dimension_numbers = #tpu.dot_dimension_numbers<[1], [0], [0], [1], [0, 0, 1, 1], [], []>} : vector<8x32xf32>, vector<32x128xf32>, vector<8x128xf32> -> vector<8x128xf32>
    %10 = vector.broadcast %5 : vector<1x128xf32> to vector<8x128xf32>
    %11 = arith.addf %9, %10 : vector<8x128xf32>
    %cst_10 = arith.constant 0.000000e+00 : f32
    %12 = vector.broadcast %cst_10 : f32 to vector<8x128xf32>
    %13 = arith.maximumf %11, %12 : vector<8x128xf32>
    %cst_11 = arith.constant dense<0.000000e+00> : vector<8x128xf32>
    %14 = tpu.matmul %13, %2, %cst_11 {dimension_numbers = #tpu.dot_dimension_numbers<[1], [0], [0], [1], [0, 0, 1, 1], [], []>} : vector<8x128xf32>, vector<128x128xf32>, vector<8x128xf32> -> vector<8x128xf32>
    %15 = vector.broadcast %6 : vector<1x128xf32> to vector<8x128xf32>
    %16 = arith.addf %14, %15 : vector<8x128xf32>
    %cst_12 = arith.constant 0.000000e+00 : f32
    %17 = vector.broadcast %cst_12 : f32 to vector<8x128xf32>
    %18 = arith.maximumf %16, %17 : vector<8x128xf32>
    %cst_13 = arith.constant dense<0.000000e+00> : vector<8x128xf32>
    %19 = tpu.matmul %18, %3, %cst_13 {dimension_numbers = #tpu.dot_dimension_numbers<[1], [0], [0], [1], [0, 0, 1, 1], [], []>} : vector<8x128xf32>, vector<128x128xf32>, vector<8x128xf32> -> vector<8x128xf32>
    %20 = vector.broadcast %7 : vector<1x128xf32> to vector<8x128xf32>
    %21 = arith.addf %19, %20 : vector<8x128xf32>
    %cst_14 = arith.constant 0.000000e+00 : f32
    %22 = vector.broadcast %cst_14 : f32 to vector<8x128xf32>
    %23 = arith.maximumf %21, %22 : vector<8x128xf32>
    %24 = vector.broadcast %4 : vector<1x128xf32> to vector<8x128xf32>
    %25 = arith.mulf %23, %24 : vector<8x128xf32>
    %cst_15 = arith.constant dense<0.000000e+00> : vector<8xf32>
    %26 = vector.multi_reduction <add>, %25, %cst_15 [1] : vector<8x128xf32> to vector<8xf32>
    %27 = vector.shape_cast %26 : vector<8xf32> to vector<1x8xf32>
    %28 = vector.broadcast %8 : vector<1x1xf32> to vector<1x8xf32>
    %29 = arith.addf %27, %28 : vector<1x8xf32>
    %c0_16 = arith.constant 0 : index
    %c0_17 = arith.constant 0 : index
    %30 = vector.load %arg3[%c0_16, %c0_17] : memref<1x8xf32, #tpu.memory_space<vmem>>, vector<1x8xf32>
    tpu.vector_store %arg3[%c0_16, %c0_17], %29 {strides = array<i32>} : memref<1x8xf32, #tpu.memory_space<vmem>>, vector<1x8xf32>,
    return
  }
  func.func @transform_0(%arg0: i32) -> (i32, i32) {
    %c0_i32 = arith.constant 0 : i32
    %c0_i32_0 = arith.constant 0 : i32
    return %arg0, %c0_i32 : i32, i32
  }
  func.func @transform_1(%arg0: i32) -> (i32, i32) {
    %c0_i32 = arith.constant 0 : i32
    %c0_i32_0 = arith.constant 0 : i32
    %c0_i32_1 = arith.constant 0 : i32
    return %c0_i32, %c0_i32_0 : i32, i32
  }
  func.func @transform_2(%arg0: i32) -> (i32, i32) {
    %c0_i32 = arith.constant 0 : i32
    %c0_i32_0 = arith.constant 0 : i32
    return %c0_i32, %arg0 : i32, i32
  }
}

</mosaic_0001>

<llo_original>
// kernel: tpu_custom_call.1
$region0: #{tpu_custom_call.1}
  #allocation0 [shape = 'u32[]', space=smem, size = 0x4, offset = 0x4, fixed_abs, tag = 'smem constant byte address 0x4 - core index']
  #allocation1 [shape = 'u32[72,128]{1,0:T(1,128)}', space=vmem, size = 0x9000, scoped, tag = 'internal scratch']
  %s0 = inlined_call_operand.hbm [shape: f32[8,32], index: 0, kind: input, shape index: {}]
  %s1 = inlined_call_operand.hbm [shape: f32[296,128], index: 1, kind: input, shape index: {}]
  %s2 = inlined_call_operand.hbm [shape: f32[1,8], index: 2, kind: output, shape index: {}]
  %s3 = sld [smem:[#allocation0]]
  $region26: #{tpu_custom_call.1} parent=0
    _
  %s5 = ssub.s32 1, %s3
  %s6 = scalar_select 0, %s5, %s3
  $region1: #{tpu_custom_call.1} parent=0
    #allocation2 [shape = 'u8[4096]{0}', space=vmem, size = 0x1000, scoped, tag = 'input window, operand 0, single buffered']
    #allocation3 [shape = 's32[1]{0}', space=sflag, size = 0x4, scoped, tag = 'scoped memory for tpu_custom_call.1']
    #allocation4 [shape = 's32[1]{0}', space=sflag, size = 0x4, scoped, tag = 'scoped memory for tpu_custom_call.1']
    #allocation5 [shape = 'u8[151552]{0}', space=vmem, size = 0x25000, scoped, tag = 'input window, operand 1, single buffered']
    #allocation6 [shape = 's32[1]{0}', space=sflag, size = 0x4, scoped, tag = 'scoped memory for tpu_custom_call.1']
    #allocation7 [shape = 'u8[512]{0}', space=vmem, size = 0x400, scoped, tag = 'output window, operand 0, single buffered']
    %7 = vsyncpa [#allocation3], 0
    %8 = vsyncpa [#allocation6], 0
    %9 = vsyncpa [#allocation4], 0
    // Predicated region
    $region2: #{tpu_custom_call.1} parent=1 // pred_check
      _
    $region3: #{tpu_custom_call.1} parent=1 // pred_check_branch
      %11 = sbr.rel (0) target = $region5
    $region4: #{tpu_custom_call.1} parent=1 // pred_region
      %13 = vsyncadd [#allocation3], 0
      %s15 = sshll.u32 %s0, 4
      %s16 = int_to_ptr.hbm [resolvable:$true] %s15
      %s17 = sshll.u32 [#allocation2], 4
      %s18 = int_to_ptr.vmem [resolvable:$true] %s17
      %20 = dma.hbm_to_vmem [thread:$0]  %s16, 128, %s18, [#allocation3]
    $region5: #{tpu_custom_call.1} parent=1 // pred_fallthru
      _
    // Predicated region
    $region6: #{tpu_custom_call.1} parent=1 // pred_check
      _
    $region7: #{tpu_custom_call.1} parent=1 // pred_check_branch
      %22 = sbr.rel (0) target = $region9
    $region8: #{tpu_custom_call.1} parent=1 // pred_region
      %24 = vsyncadd [#allocation6], 0
      %s25 = sshll.u32 %s1, 4
      %s26 = int_to_ptr.hbm [resolvable:$true] %s25
      %s27 = sshll.u32 [#allocation5], 4
      %s28 = int_to_ptr.vmem [resolvable:$true] %s27
      %33 = dma.hbm_to_vmem [thread:$0]  %s26, 4736, %s28, [#allocation6], 128, 128, 8
    $region9: #{tpu_custom_call.1} parent=1 // pred_fallthru
      _
    // Predicated region
    $region10: #{tpu_custom_call.1} parent=1 // pred_check
      _
    $region11: #{tpu_custom_call.1} parent=1 // pred_check_branch
      %35 = sbr.rel (0) target = $region13
    $region12: #{tpu_custom_call.1} parent=1 // pred_region
      %37 = dma.done [#allocation3], 128
    $region13: #{tpu_custom_call.1} parent=1 // pred_fallthru
      _
    // Predicated region
    $region14: #{tpu_custom_call.1} parent=1 // pred_check
      _
    $region15: #{tpu_custom_call.1} parent=1 // pred_check_branch
      %39 = sbr.rel (0) target = $region17
    $region16: #{tpu_custom_call.1} parent=1 // pred_region
      %41 = dma.done [#allocation6], 4736
    $region17: #{tpu_custom_call.1} parent=1 // pred_fallthru
      _
    %v42 = vld [vmem:[#allocation2] sm:$0xff]
    %v43 = vld [vmem:[#allocation5] sm:$0xff]
    %v44 = vld [vmem:[#allocation5 + $0x8] sm:$0xff]
    %v45 = vld [vmem:[#allocation5 + $0x10] sm:$0xff]
    %v46 = vld [vmem:[#allocation5 + $0x18] sm:$0xff]
    %v47 = vld [vmem:[#allocation5 + $0x20] sm:$0xff]
    %v48 = vld [vmem:[#allocation5 + $0x28] sm:$0xff]
    %v49 = vld [vmem:[#allocation5 + $0x30] sm:$0xff]
    %v50 = vld [vmem:[#allocation5 + $0x38] sm:$0xff]
    %v51 = vld [vmem:[#allocation5 + $0x40] sm:$0xff]
    %v52 = vld [vmem:[#allocation5 + $0x48] sm:$0xff]
    %v53 = vld [vmem:[#allocation5 + $0x50] sm:$0xff]
    %v54 = vld [vmem:[#allocation5 + $0x58] sm:$0xff]
    %v55 = vld [vmem:[#allocation5 + $0x60] sm:$0xff]
    %v56 = vld [vmem:[#allocation5 + $0x68] sm:$0xff]
    %v57 = vld [vmem:[#allocation5 + $0x70] sm:$0xff]
    %v58 = vld [vmem:[#allocation5 + $0x78] sm:$0xff]
    %v59 = vld [vmem:[#allocation5 + $0x80] sm:$0xff]
    %v60 = vld [vmem:[#allocation5 + $0x88] sm:$0xff]
    %v61 = vld [vmem:[#allocation5 + $0x90] sm:$0xff]
    %v62 = vld [vmem:[#allocation5 + $0x98] sm:$0xff]
    %v63 = vld [vmem:[#allocation5 + $0xa0] sm:$0xff]
    %v64 = vld [vmem:[#allocation5 + $0xa8] sm:$0xff]
    %v65 = vld [vmem:[#allocation5 + $0xb0] sm:$0xff]
    %v66 = vld [vmem:[#allocation5 + $0xb8] sm:$0xff]
    %v67 = vld [vmem:[#allocation5 + $0xc0] sm:$0xff]
    %v68 = vld [vmem:[#allocation5 + $0xc8] sm:$0xff]
    %v69 = vld [vmem:[#allocation5 + $0xd0] sm:$0xff]
    %v70 = vld [vmem:[#allocation5 + $0xd8] sm:$0xff]
    %v71 = vld [vmem:[#allocation5 + $0xe0] sm:$0xff]
    %v72 = vld [vmem:[#allocation5 + $0xe8] sm:$0xff]
    %v73 = vld [vmem:[#allocation5 + $0xf0] sm:$0xff]
    %v74 = vld [vmem:[#allocation5 + $0xf8] sm:$0xff]
    %v75 = vld [vmem:[#allocation5 + $0x100] sm:$0xff]
    %v76 = vld [vmem:[#allocation5 + $0x108] sm:$0xff]
    %v77 = vld [vmem:[#allocation5 + $0x110] sm:$0xff]
    %v78 = vld [vmem:[#allocation5 + $0x118] sm:$0xff]
    %v79 = vld [vmem:[#allocation5 + $0x120] sm:$0x1]
    %v80 = vld [vmem:[#allocation5 + $0x121] sm:$0x1]
    %v81 = vld [vmem:[#allocation5 + $0x122] sm:$0x1]
    %v82 = vld [vmem:[#allocation5 + $0x123] sm:$0x1]
    %v83 = vld [vmem:[#allocation5 + $0x124] sm:$0x1]
    %v84 = vperm.slane %v80, 0
    %vm85 = vcmask 261120
    %v87 = vsel %vm85, %v42, 0
    %89 = vmatpush.msra.mxu0 0.0
    %90 = vmatpush.msra.mxu0 0.0
    %91 = vmatpush.msra.mxu0 0.0
    %92 = vmatpush.msra.mxu0 0.0
    %93 = vmatpush.msra.mxu0 0.0
    %94 = vmatpush.msra.mxu0 0.0
    %95 = vmatpush.msra.mxu0 0.0
    %96 = vmatpush.msra.mxu0 0.0
    %97 = vmatpush.msra.mxu0 0.0
    %98 = vmatpush.msra.mxu0 0.0
    %99 = vmatpush.msra.mxu0 0.0
    %100 = vmatpush.msra.mxu0 0.0
    %101 = vmatpush.msra.mxu0 %v46
    %102 = vmatpush.msra.mxu0 %v45
    %103 = vmatpush.msra.mxu0 %v44
    %104 = vmatpush.msra.mxu0 %v43
    %105 = vmatmul.f32.gmra.mxu0 %v87
    %v106 = vpop.f32.mrf.mxu0
    %v107 = vadd.f32 %v84, %v106
    %108 = vdwg.mxu0
    %v109 = vmax.f32 %v107, 0.0
    %v110 = vperm.slane %v81, 0
    %111 = vmatpush.msra.mxu0 %v62
    %112 = vmatpush.msra.mxu0 %v61
    %113 = vmatpush.msra.mxu0 %v60
    %114 = vmatpush.msra.mxu0 %v59
    %115 = vmatpush.msra.mxu0 %v58
    %116 = vmatpush.msra.mxu0 %v57
    %117 = vmatpush.msra.mxu0 %v56
    %118 = vmatpush.msra.mxu0 %v55
    %119 = vmatpush.msra.mxu0 %v54
    %120 = vmatpush.msra.mxu0 %v53
    %121 = vmatpush.msra.mxu0 %v52
    %122 = vmatpush.msra.mxu0 %v51
    %123 = vmatpush.msra.mxu0 %v50
    %124 = vmatpush.msra.mxu0 %v49
    %125 = vmatpush.msra.mxu0 %v48
    %126 = vmatpush.msra.mxu0 %v47
    %127 = vmatmul.f32.gmra.mxu0 %v109
    %v128 = vpop.f32.mrf.mxu0
    %v129 = vadd.f32 %v110, %v128
    %130 = vdwg.mxu0
    %v131 = vmax.f32 %v129, 0.0
    %v132 = vperm.slane %v82, 0
    %133 = vmatpush.msra.mxu0 %v78
    %134 = vmatpush.msra.mxu0 %v77
    %135 = vmatpush.msra.mxu0 %v76
    %136 = vmatpush.msra.mxu0 %v75
    %137 = vmatpush.msra.mxu0 %v74
    %138 = vmatpush.msra.mxu0 %v73
    %139 = vmatpush.msra.mxu0 %v72
    %140 = vmatpush.msra.mxu0 %v71
    %141 = vmatpush.msra.mxu0 %v70
    %142 = vmatpush.msra.mxu0 %v69
    %143 = vmatpush.msra.mxu0 %v68
    %144 = vmatpush.msra.mxu0 %v67
    %145 = vmatpush.msra.mxu0 %v66
    %146 = vmatpush.msra.mxu0 %v65
    %147 = vmatpush.msra.mxu0 %v64
    %148 = vmatpush.msra.mxu0 %v63
    %149 = vmatmul.f32.gmra.mxu0 %v131
    %v150 = vpop.f32.mrf.mxu0
    %v151 = vadd.f32 %v132, %v150
    %152 = vdwg.mxu0
    %v153 = vmax.f32 %v151, 0.0
    %v154 = vperm.slane %v79, 0
    %v155 = vmul.f32 %v153, %v154
    %156 = vadd.xlane.f32.xlu0 %v155
    %v157 = vpop.xlane.xlu0 %156
    %159 = vset.pattern.permute.xlu0 0
    %160 = vperm.xlu0 %159, %v83
    %v161 = vpop.permute.xlu0 %160
    %v162 = vperm.slane %v161, 0
    %v164 = vadd.f32 %v157, %v162
    %166 = vset.pattern.permute.xlu0 0
    %167 = vperm.xlu0 %166, %v164
    %v168 = vpop.permute.xlu0 %167
    %v169 = vlaneseq
    %v170 = vand.u32 %v169, 127
    %v171 = vperm.slane %v168, %v170
    %vm173 = vcmask 57344
    %174 = vst.msk [vmem:[#allocation7] sm:$0x1] %vm173, %v171
    // Predicated region
    $region18: #{tpu_custom_call.1} parent=1 // pred_check
      _
    $region19: #{tpu_custom_call.1} parent=1 // pred_check_branch
      %176 = sbr.rel (0) target = $region21
    $region20: #{tpu_custom_call.1} parent=1 // pred_region
      %178 = vsyncadd [#allocation4], 0
      %s180 = sshll.u32 [#allocation7], 4
      %s181 = int_to_ptr.vmem [resolvable:$true] %s180
      %s182 = sshll.u32 %s2, 4
      %s183 = int_to_ptr.hbm [resolvable:$true] %s182
      %185 = dma.vmem_to_hbm [thread:$0]  %s181, 16, %s183, [#allocation4]
    $region21: #{tpu_custom_call.1} parent=1 // pred_fallthru
      _
    // Predicated region
    $region22: #{tpu_custom_call.1} parent=1 // pred_check
      _
    $region23: #{tpu_custom_call.1} parent=1 // pred_check_branch
      %187 = sbr.rel (0) target = $region25
    $region24: #{tpu_custom_call.1} parent=1 // pred_region
      %189 = dma.done [#allocation4], 16
    $region25: #{tpu_custom_call.1} parent=1 // pred_fallthru
      _
    %190 = vsyncpa [#allocation3], 1
    %191 = vsyncpa [#allocation6], 1
    %192 = vsyncpa [#allocation4], 1

</llo_original>
